<compile_context>
chip_gen: v5e
topology: v5e:2x2
jax: 0.10.0
libtpu: 0.0.40
codegen_flags: <defaults>
</compile_context>

<pallas_src>
import math
import functools

import jax
import jax.numpy as jnp
import numpy as np
from jax import lax
from jax.experimental import pallas as pl
from jax.experimental.pallas import tpu as pltpu

EPS = 1e-6


# --------------------------- generation-aware knobs ---------------------------

_VMEM_LIMIT = None


def _vmem_limit():
    """~75% of physical VMEM, capped at 96 MiB (v5e/v6e), floor 32 MiB."""
    global _VMEM_LIMIT
    if _VMEM_LIMIT is None:
        cap = None
        try:
            get_info = getattr(pltpu, "get_tpu_info", None)
            if get_info is not None:
                cap = getattr(get_info(), "vmem_capacity_bytes", None)
        except Exception:
            cap = None
        if not cap:
            cap = 64 * 1024 * 1024          # conservative (v7x per-TC)
        _VMEM_LIMIT = int(max(32 * 1024 * 1024,
                              min(0.75 * cap, 96 * 1024 * 1024)))
    return _VMEM_LIMIT


_BUFFERED1_OK = None


def _probe_buffered1():
    """Check (once, with a tiny kernel) that pipeline_mode=pl.Buffered(1) lowers."""
    def k(x_ref, o_ref):
        o_ref[...] = x_ref[...] + 1.0
    try:
        spec = pl.BlockSpec((8, 128), lambda i: (0, 0), pipeline_mode=pl.Buffered(1))
        out = pl.pallas_call(
            k,
            out_shape=jax.ShapeDtypeStruct((8, 128), jnp.float32),
            grid=(2,),
            in_specs=[spec],
            out_specs=pl.BlockSpec((8, 128), lambda i: (0, 0)),
        )(jnp.zeros((8, 128), jnp.float32))
        jax.block_until_ready(out)
        return True
    except Exception:
        return False


def _resident_spec(block_shape, index_map):
    """BlockSpec for weights whose block index never changes: single-buffered
    (halves their VMEM footprint) when the installed Pallas supports it."""
    global _BUFFERED1_OK
    if _BUFFERED1_OK is None:
        _BUFFERED1_OK = _probe_buffered1()
    if _BUFFERED1_OK:
        return pl.BlockSpec(block_shape, index_map, pipeline_mode=pl.Buffered(1))
    return pl.BlockSpec(block_shape, index_map)


def _choose_token_tile(n):
    for t in (1024, 512, 256, 128, 64, 32, 16, 8):
        if n % t == 0:
            return t
    return n


def _choose_q_tile(s):
    for t in (256, 128, 64, 32, 16, 8):
        if s % t == 0:
            return t
    return s


def _choose_dff_tile(dff):
    for t in (2048, 1024, 512, 256, 128):   # multiples of 128 (lane constraint)
        if dff % t == 0:
            return t
    return dff


def _isize(dt):
    return np.dtype(dt).itemsize


# ------------------------------ shared helpers --------------------------------

def _layernorm(x, a, b):
    # Annotated-Transformer LayerNorm: unbiased std (N-1), eps added to std.
    d = x.shape[-1]
    mean = jnp.mean(x, axis=-1, keepdims=True)
    var = jnp.sum((x - mean) ** 2, axis=-1, keepdims=True) * (1.0 / (d - 1))
    inv = pl.reciprocal(jnp.sqrt(var) + EPS, approx=False)   # (tm,1) EUP recips
    return a * ((x - mean) * inv) + b


def _mm(a, b, dot_dtype):
    # MXU matmul with optional bf16 inputs, always f32 accumulation.
    return jnp.dot(a.astype(dot_dtype), b.astype(dot_dtype),
                   preferred_element_type=jnp.float32)


# ------------------------------ Pallas kernels --------------------------------

def _ln_qkv_kernel(x_ref, a_ref, b_ref, wqkv_ref, bqkv_ref, qkv_ref, *, dot_dtype):
    """LayerNorm + fused QKV projection; one wide lane-dense (tm, 3D) store."""
    xn = _layernorm(x_ref[...], a_ref[...], b_ref[...])
    h = _mm(xn, wqkv_ref[...], dot_dtype) + bqkv_ref[...]
    qkv_ref[...] = h.astype(qkv_ref.dtype)


def _attn_kernel(q_ref, k_ref, v_ref, bias_ref, wo_ref, bo_ref, xres_ref,
                 o_ref, acc_ref, *, d_model, num_heads, dot_dtype):
    """One (batch, query-tile) step of multi-head attention + out-proj + residual.

    Heads are split along the lane axis; each head's PV result is written into
    its lane range of the (tq, D) f32 scratch (no lane-axis concatenate), then
    one wide Wo matmul + residual produces the lane-dense output tile.
    1/sqrt(dk) is already folded into Wq host-side.
    """
    dk = d_model // num_heads
    split = q_ref.shape[-1] == d_model      # column-split QKV blocks (D % 128 == 0)
    if split:
        q_all, k_all, v_all = q_ref[...], k_ref[...], v_ref[...]
    else:                                   # fallback: full (·, 3D) blocks
        q_all = q_ref[:, :d_model]
        k_all = k_ref[:, d_model:2 * d_model]
        v_all = v_ref[:, 2 * d_model:]
    bias = bias_ref[0]                      # (1, S) key-mask bias

    for h in range(num_heads):              # static unroll over heads
        lo = h * dk
        q = q_all[:, lo:lo + dk]
        k = k_all[:, lo:lo + dk]
        v = v_all[:, lo:lo + dk]
        s = lax.dot_general(q.astype(dot_dtype), k.astype(dot_dtype),
                            (((1,), (1,)), ((), ())),
                            preferred_element_type=jnp.float32)     # (tq, S)
        s = s + bias
        m = jnp.max(s, axis=-1, keepdims=True)
        p = jnp.exp(s - m)
        l = jnp.sum(p, axis=-1, keepdims=True)
        attn = p * pl.reciprocal(l, approx=True)                    # EUP, not VPU div
        acc_ref[:, lo:lo + dk] = jnp.dot(
            attn.astype(dot_dtype), v.astype(dot_dtype),
            preferred_element_type=jnp.float32)

    o_ref[...] = (xres_ref[...]
                  + _mm(acc_ref[...], wo_ref[...], dot_dtype)
                  + bo_ref[...])
    # TODO(synk): for long S also tile keys with an online-softmax (flash)
    # accumulator, and loop heads with lax.fori_loop + pl.ds lane offsets.


def _ln_ffn_res_kernel(x_ref, a_ref, b_ref, w1_ref, b1_ref, w2_ref, b2_ref,
                       o_ref, xn_ref, acc_ref, *, dot_dtype):
    """LayerNorm + FFN(ReLU) + residual, tiled over (token, DFF) with an
    f32 VMEM accumulator; LN result cached in VMEM across the DFF axis."""
    kk = pl.program_id(1)

    @pl.when(kk == 0)
    def _():
        xn_ref[...] = _layernorm(x_ref[...], a_ref[...], b_ref[...]).astype(xn_ref.dtype)
        acc_ref[...] = jnp.zeros_like(acc_ref)

    h = _mm(xn_ref[...], w1_ref[...], dot_dtype) + b1_ref[...]
    h = jnp.maximum(h, 0.0)
    acc_ref[...] += _mm(h, w2_ref[...], dot_dtype)

    @pl.when(kk == pl.num_programs(1) - 1)
    def _():
        o_ref[...] = x_ref[...] + acc_ref[...] + b2_ref[...]


# --------------------------------- wrappers ------------------------------------

def ln_qkv(x2d, ln_a, ln_b, wqkv, bqkv, *, dot_dtype, out_dtype):
    n, d = x2d.shape
    tm = _choose_token_tile(n)
    kernel = functools.partial(_ln_qkv_kernel, dot_dtype=dot_dtype)
    cost = pl.CostEstimate(
        flops=2 * n * d * 3 * d,
        transcendentals=0,
        bytes_accessed=n * d * 4 + 3 * d * d * _isize(wqkv.dtype)
        + n * 3 * d * _isize(out_dtype) + 8 * d)
    return pl.pallas_call(
        kernel,
        out_shape=jax.ShapeDtypeStruct((n, 3 * d), out_dtype),
        grid=(n // tm,),
        in_specs=[
            pl.BlockSpec((tm, d), lambda i: (i, 0)),          # x tile
            _resident_spec((1, d), lambda i: (0, 0)),         # ln a
            _resident_spec((1, d), lambda i: (0, 0)),         # ln b
            _resident_spec((d, 3 * d), lambda i: (0, 0)),     # Wqkv
            _resident_spec((1, 3 * d), lambda i: (0, 0)),     # bqkv
        ],
        out_specs=pl.BlockSpec((tm, 3 * d), lambda i: (i, 0)),
        compiler_params=pltpu.CompilerParams(
            dimension_semantics=("parallel",),
            vmem_limit_bytes=_vmem_limit()),
        cost_estimate=cost,
    )(x2d, ln_a.reshape(1, d), ln_b.reshape(1, d), wqkv, bqkv.reshape(1, 3 * d))


def attention_proj_residual(qkv, bias, wo, bo, xres, *,
                            batch, seq, num_heads, dot_dtype):
    n, d3 = qkv.shape
    d = d3 // 3
    tq = _choose_q_tile(seq)
    nq = seq // tq
    split = (d % 128 == 0)
    if split:
        # Q/K/V picked out of the fused (N, 3D) slab by column block index.
        q_spec = pl.BlockSpec((tq, d), lambda b, i: (b * nq + i, 0))
        k_spec = pl.BlockSpec((seq, d), lambda b, i: (b, 1))
        v_spec = pl.BlockSpec((seq, d), lambda b, i: (b, 2))
    else:
        # D not lane-aligned: fall back to full-width 3D blocks, slice in-kernel.
        q_spec = pl.BlockSpec((tq, d3), lambda b, i: (b * nq + i, 0))
        k_spec = pl.BlockSpec((seq, d3), lambda b, i: (b, 0))
        v_spec = pl.BlockSpec((seq, d3), lambda b, i: (b, 0))

    kernel = functools.partial(_attn_kernel, d_model=d,
                               num_heads=num_heads, dot_dtype=dot_dtype)
    cost = pl.CostEstimate(
        flops=batch * (4 * seq * seq * d + 2 * seq * d * d),
        transcendentals=batch * num_heads * seq * seq,
        bytes_accessed=3 * n * d * _isize(qkv.dtype) + 2 * n * d * 4
        + d * d * _isize(wo.dtype) + batch * seq * 4)
    return pl.pallas_call(
        kernel,
        out_shape=jax.ShapeDtypeStruct((n, d), jnp.float32),
        grid=(batch, nq),
        in_specs=[
            q_spec, k_spec, v_spec,
            pl.BlockSpec((1, 1, seq), lambda b, i: (b, 0, 0)),   # key-mask bias
            _resident_spec((d, d), lambda b, i: (0, 0)),         # Wo
            _resident_spec((1, d), lambda b, i: (0, 0)),         # bo
            pl.BlockSpec((tq, d), lambda b, i: (b * nq + i, 0)), # residual x
        ],
        out_specs=pl.BlockSpec((tq, d), lambda b, i: (b * nq + i, 0)),
        scratch_shapes=[pltpu.VMEM((tq, d), jnp.float32)],       # per-head PV slab
        compiler_params=pltpu.CompilerParams(
            dimension_semantics=("parallel", "parallel"),
            vmem_limit_bytes=_vmem_limit()),
        cost_estimate=cost,
    )(qkv, qkv, qkv, bias, wo, bo.reshape(1, d), xres)


def ln_ffn_residual(x2d, ln_a, ln_b, w1, b1, w2, b2, *, dot_dtype):
    n, d = x2d.shape
    dff = w1.shape[1]
    tm = _choose_token_tile(n)
    tdff = _choose_dff_tile(dff)
    nk = dff // tdff
    kernel = functools.partial(_ln_ffn_res_kernel, dot_dtype=dot_dtype)
    cost = pl.CostEstimate(
        flops=4 * n * d * dff,
        transcendentals=0,
        bytes_accessed=2 * n * d * 4 + 2 * d * dff * _isize(w1.dtype)
        + (dff + 3 * d) * 4)
    return pl.pallas_call(
        kernel,
        out_shape=jax.ShapeDtypeStruct((n, d), jnp.float32),
        grid=(n // tm, nk),
        in_specs=[
            pl.BlockSpec((tm, d), lambda i, k: (i, 0)),       # x (LN + residual)
            _resident_spec((1, d), lambda i, k: (0, 0)),      # ln a
            _resident_spec((1, d), lambda i, k: (0, 0)),      # ln b
            pl.BlockSpec((d, tdff), lambda i, k: (0, k)),     # W1 column tile
            pl.BlockSpec((1, tdff), lambda i, k: (0, k)),     # b1 tile
            pl.BlockSpec((tdff, d), lambda i, k: (k, 0)),     # W2 row tile
            _resident_spec((1, d), lambda i, k: (0, 0)),      # b2
        ],
        out_specs=pl.BlockSpec((tm, d), lambda i, k: (i, 0)),
        scratch_shapes=[pltpu.VMEM((tm, d), dot_dtype),       # cached LN(x)
                        pltpu.VMEM((tm, d), jnp.float32)],    # accumulator
        compiler_params=pltpu.CompilerParams(
            dimension_semantics=("parallel", "arbitrary"),
            vmem_limit_bytes=_vmem_limit()),
        cost_estimate=cost,
    )(x2d, ln_a.reshape(1, d), ln_b.reshape(1, d),
      w1, b1.reshape(1, dff), w2, b2.reshape(1, d))


def encoder_layer_forward(x, mask, params, *, matmul_dtype=jnp.float32):
    """x: (B, S, D) float32, mask: (B, S) {0,1} key mask (0 = masked).

    matmul_dtype=jnp.bfloat16 feeds the MXU (and stores the QKV slab and the
    weights) in bf16 with f32 accumulation — recommended on all generations
    (v5e/v6e/v7x MXUs take bf16 natively; the VPU/EUP vector math stays f32).
    """
    B, S, D = x.shape
    H = params["num_heads"]
    N = B * S
    dk = D // H
    xf = x.reshape(N, D)
    dd = matmul_dtype

    # 1/sqrt(dk) folded into Wq/bq host-side (one-time weight transform);
    # fused (D, 3D) QKV weight so LN(x) is read once per token tile.
    q_scale = 1.0 / math.sqrt(dk)
    wqkv = jnp.concatenate(
        [params["wq"] * q_scale, params["wk"], params["wv"]], axis=1)
    bqkv = jnp.concatenate(
        [params["bq"] * q_scale, params["bk"], params["bv"]], axis=0)

    if dd != jnp.float32:        # store matmul weights in the MXU input dtype
        wqkv = wqkv.astype(dd)
        wo = params["wo"].astype(dd)
        w1 = params["w1"].astype(dd)
        w2 = params["w2"].astype(dd)
    else:
        wo, w1, w2 = params["wo"], params["w1"], params["w2"]

    # ---- sublayer 0: x + self_attn(LayerNorm(x)) ----
    qkv = ln_qkv(xf, params["ln1_a"], params["ln1_b"], wqkv, bqkv,
                 dot_dtype=dd, out_dtype=dd)
    bias = jnp.where(mask == 0, -1e9, 0.0).astype(jnp.float32).reshape(B, 1, S)
    x1 = attention_proj_residual(qkv, bias, wo, params["bo"], xf,
                                 batch=B, seq=S, num_heads=H, dot_dtype=dd)

    # ---- sublayer 1: x + feed_forward(LayerNorm(x)) ----
    out = ln_ffn_residual(x1, params["ln2_a"], params["ln2_b"],
                          w1, params["b1"], w2, params["b2"], dot_dtype=dd)
    return out.reshape(B, S, D)


# ------------------------------ pure-JAX reference -----------------------------

def _ref_layernorm(x, a, b):
    d = x.shape[-1]
    mean = jnp.mean(x, axis=-1, keepdims=True)
    var = jnp.sum((x - mean) ** 2, axis=-1, keepdims=True) / (d - 1)
    return a * (x - mean) / (jnp.sqrt(var) + EPS) + b


def _ref_forward(x, mask, p):
    B, S, D = x.shape
    H = p["num_heads"]
    dk = D // H
    xn = _ref_layernorm(x, p["ln1_a"], p["ln1_b"])

    def proj(t, w, b):
        return (t @ w + b).reshape(B, S, H, dk).transpose(0, 2, 1, 3)

    q = proj(xn, p["wq"], p["bq"])
    k = proj(xn, p["wk"], p["bk"])
    v = proj(xn, p["wv"], p["bv"])
    scores = jnp.einsum("bhqd,bhkd->bhqk", q, k) / math.sqrt(dk)
    scores = jnp.where(mask[:, None, None, :] == 0, -1e9, scores)
    attn = jax.nn.softmax(scores, axis=-1)
    a = jnp.einsum("bhqk,bhkd->bhqd", attn, v).transpose(0, 2, 1, 3).reshape(B, S, D)
    x1 = x + (a @ p["wo"] + p["bo"])
    xn2 = _ref_layernorm(x1, p["ln2_a"], p["ln2_b"])
    ff = jnp.maximum(xn2 @ p["w1"] + p["b1"], 0.0) @ p["w2"] + p["b2"]
    return x1 + ff


# ------------------------------------ main --------------------------------------

if __name__ == "__main__":
    B, S, D, H, DFF = 2, 8, 128, 4, 256

    ks = jax.random.split(jax.random.PRNGKey(0), 14)
    scale = 0.05

    params = {
        "num_heads": H,
        "ln1_a": jnp.ones((D,), jnp.float32),
        "ln1_b": jnp.zeros((D,), jnp.float32),
        "ln2_a": jnp.ones((D,), jnp.float32),
        "ln2_b": jnp.zeros((D,), jnp.float32),
        "wq": scale * jax.random.normal(ks[0], (D, D), jnp.float32),
        "bq": scale * jax.random.normal(ks[1], (D,), jnp.float32),
        "wk": scale * jax.random.normal(ks[2], (D, D), jnp.float32),
        "bk": scale * jax.random.normal(ks[3], (D,), jnp.float32),
        "wv": scale * jax.random.normal(ks[4], (D, D), jnp.float32),
        "bv": scale * jax.random.normal(ks[5], (D,), jnp.float32),
        "wo": scale * jax.random.normal(ks[6], (D, D), jnp.float32),
        "bo": scale * jax.random.normal(ks[7], (D,), jnp.float32),
        "w1": scale * jax.random.normal(ks[8], (D, DFF), jnp.float32),
        "b1": scale * jax.random.normal(ks[9], (DFF,), jnp.float32),
        "w2": scale * jax.random.normal(ks[10], (DFF, D), jnp.float32),
        "b2": scale * jax.random.normal(ks[11], (D,), jnp.float32),
    }

    x = jax.random.normal(ks[12], (B, S, D), jnp.float32)
    # key-padding mask: 1 = attend, 0 = masked; mask the last two keys of batch 1
    mask = jnp.ones((B, S), jnp.int32).at[1, -2:].set(0)

    ref = jax.block_until_ready(_ref_forward(x, mask, params))

    # f32 MXU path (tight-tolerance check)
    out = jax.block_until_ready(encoder_layer_forward(x, mask, params))
    np.testing.assert_allclose(np.asarray(out), np.asarray(ref),
                               rtol=1e-3, atol=1e-3)

    # bf16 MXU-input path (recommended on v5e/v6e/v7x) — f32 accumulation,
    # looser tolerance for the bf16 rounding of operands and the QKV slab.
    out_bf16 = jax.block_until_ready(
        encoder_layer_forward(x, mask, params, matmul_dtype=jnp.bfloat16))
    np.testing.assert_allclose(np.asarray(out_bf16), np.asarray(ref),
                               rtol=2e-2, atol=2e-2)

    print("KERNEL_OK")
</pallas_src>

<mosaic_0001>
module attributes {stable_mosaic.version = 11 : i64} {
  func.func @k(%arg0: i32, %arg1: memref<8x128xf32, #tpu.memory_space<vmem>>, %arg2: memref<8x128xf32, #tpu.memory_space<vmem>>) attributes {dimension_semantics = [#tpu.dimension_semantics<arbitrary>], iteration_bounds = array<i64: 2>, scalar_prefetch = 0 : i64, scratch_operands = 0 : i64, tpu.core_type = #tpu.core_type<tc>, window_params = [{pipeline_mode = #tpu.pipeline_mode<synchronous>, transform_indices = @transform_0, window_bounds = array<i64: 8, 128>}, {pipeline_mode = #tpu.pipeline_mode<synchronous>, transform_indices = @transform_1, window_bounds = array<i64: 8, 128>}]} {
    %c0 = arith.constant 0 : index
    %c0_0 = arith.constant 0 : index
    %0 = vector.load %arg1[%c0, %c0_0] : memref<8x128xf32, #tpu.memory_space<vmem>>, vector<8x128xf32>
    %cst = arith.constant 1.000000e+00 : f32
    %1 = vector.broadcast %cst : f32 to vector<8x128xf32>
    %2 = arith.addf %0, %1 : vector<8x128xf32>
    %c0_1 = arith.constant 0 : index
    %c0_2 = arith.constant 0 : index
    %3 = vector.load %arg2[%c0_1, %c0_2] : memref<8x128xf32, #tpu.memory_space<vmem>>, vector<8x128xf32>
    tpu.vector_store %arg2[%c0_1, %c0_2], %2 {strides = array<i32>} : memref<8x128xf32, #tpu.memory_space<vmem>>, vector<8x128xf32>,
    return
  }
  func.func @transform_0(%arg0: i32) -> (i32, i32) {
    %c0_i32 = arith.constant 0 : i32
    %c0_i32_0 = arith.constant 0 : i32
    %c0_i32_1 = arith.constant 0 : i32
    return %c0_i32, %c0_i32_0 : i32, i32
  }
  func.func @transform_1(%arg0: i32) -> (i32, i32) {
    %c0_i32 = arith.constant 0 : i32
    %c0_i32_0 = arith.constant 0 : i32
    %c0_i32_1 = arith.constant 0 : i32
    return %c0_i32, %c0_i32_0 : i32, i32
  }
}

module attributes {stable_mosaic.version = 11 : i64} {
  func.func @_ln_qkv_kernel(%arg0: i32, %arg1: memref<16x128xf32, #tpu.memory_space<vmem>>, %arg2: memref<1x128xf32, #tpu.memory_space<vmem>>, %arg3: memref<1x128xf32, #tpu.memory_space<vmem>>, %arg4: memref<128x384xf32, #tpu.memory_space<vmem>>, %arg5: memref<1x384xf32, #tpu.memory_space<vmem>>, %arg6: memref<16x384xf32, #tpu.memory_space<vmem>>) attributes {dimension_semantics = [#tpu.dimension_semantics<parallel>], iteration_bounds = array<i64: 1>, scalar_prefetch = 0 : i64, scratch_operands = 0 : i64, tpu.core_type = #tpu.core_type<tc>, window_params = [{transform_indices = @transform_0, window_bounds = array<i64: 16, 128>}, {pipeline_mode = #tpu.pipeline_mode<synchronous>, transform_indices = @transform_1, window_bounds = array<i64: 1, 128>}, {pipeline_mode = #tpu.pipeline_mode<synchronous>, transform_indices = @transform_2, window_bounds = array<i64: 1, 128>}, {pipeline_mode = #tpu.pipeline_mode<synchronous>, transform_indices = @transform_3, window_bounds = array<i64: 128, 384>}, {pipeline_mode = #tpu.pipeline_mode<synchronous>, transform_indices = @transform_4, window_bounds = array<i64: 1, 384>}, {transform_indices = @transform_5, window_bounds = array<i64: 16, 384>}]} {
    %c0 = arith.constant 0 : index
    %c0_0 = arith.constant 0 : index
    %0 = vector.load %arg1[%c0, %c0_0] : memref<16x128xf32, #tpu.memory_space<vmem>>, vector<16x128xf32>
    %c0_1 = arith.constant 0 : index
    %c0_2 = arith.constant 0 : index
    %1 = vector.load %arg2[%c0_1, %c0_2] : memref<1x128xf32, #tpu.memory_space<vmem>>, vector<1x128xf32>
    %c0_3 = arith.constant 0 : index
    %c0_4 = arith.constant 0 : index
    %2 = vector.load %arg3[%c0_3, %c0_4] : memref<1x128xf32, #tpu.memory_space<vmem>>, vector<1x128xf32>
    %cst = arith.constant dense<0.000000e+00> : vector<16xf32>
    %3 = vector.multi_reduction <add>, %0, %cst [1] : vector<16x128xf32> to vector<16xf32>
    %4 = vector.shape_cast %3 : vector<16xf32> to vector<16x1xf32>
    %cst_5 = arith.constant 1.280000e+02 : f32
    %5 = vector.broadcast %cst_5 : f32 to vector<16x1xf32>
    %6 = arith.divf %4, %5 : vector<16x1xf32>
    %7 = vector.broadcast %6 : vector<16x1xf32> to vector<16x128xf32>
    %8 = arith.subf %0, %7 : vector<16x128xf32>
    %9 = arith.mulf %8, %8 : vector<16x128xf32>
    %cst_6 = arith.constant dense<0.000000e+00> : vector<16xf32>
    %10 = vector.multi_reduction <add>, %9, %cst_6 [1] : vector<16x128xf32> to vector<16xf32>
    %11 = vector.shape_cast %10 : vector<16xf32> to vector<16x1xf32>
    %cst_7 = arith.constant 0.00787401571 : f32
    %12 = vector.broadcast %cst_7 : f32 to vector<16x1xf32>
    %13 = arith.mulf %11, %12 : vector<16x1xf32>
    %14 = math.sqrt %13 : vector<16x1xf32>
    %cst_8 = arith.constant 9.99999997E-7 : f32
    %15 = vector.broadcast %cst_8 : f32 to vector<16x1xf32>
    %16 = arith.addf %14, %15 : vector<16x1xf32>
    %17 = tpu.reciprocal %16 : vector<16x1xf32> -> vector<16x1xf32>
    %18 = vector.broadcast %6 : vector<16x1xf32> to vector<16x128xf32>
    %19 = arith.subf %0, %18 : vector<16x128xf32>
    %20 = vector.broadcast %17 : vector<16x1xf32> to vector<16x128xf32>
    %21 = arith.mulf %19, %20 : vector<16x128xf32>
    %22 = vector.broadcast %1 : vector<1x128xf32> to vector<16x128xf32>
    %23 = arith.mulf %22, %21 : vector<16x128xf32>
    %24 = vector.broadcast %2 : vector<1x128xf32> to vector<16x128xf32>
    %25 = arith.addf %23, %24 : vector<16x128xf32>
    %c0_9 = arith.constant 0 : index
    %c0_10 = arith.constant 0 : index
    %26 = vector.load %arg4[%c0_9, %c0_10] : memref<128x384xf32, #tpu.memory_space<vmem>>, vector<128x384xf32>
    %cst_11 = arith.constant dense<0.000000e+00> : vector<16x384xf32>
    %27 = tpu.matmul %25, %26, %cst_11 {dimension_numbers = #tpu.dot_dimension_numbers<[1], [0], [0], [1], [0, 0, 1, 1], [], []>} : vector<16x128xf32>, vector<128x384xf32>, vector<16x384xf32> -> vector<16x384xf32>
    %c0_12 = arith.constant 0 : index
    %c0_13 = arith.constant 0 : index
    %28 = vector.load %arg5[%c0_12, %c0_13] : memref<1x384xf32, #tpu.memory_space<vmem>>, vector<1x384xf32>
    %29 = vector.broadcast %28 : vector<1x384xf32> to vector<16x384xf32>
    %30 = arith.addf %27, %29 : vector<16x384xf32>
    %c0_14 = arith.constant 0 : index
    %c0_15 = arith.constant 0 : index
    %31 = vector.load %arg6[%c0_14, %c0_15] : memref<16x384xf32, #tpu.memory_space<vmem>>, vector<16x384xf32>
    tpu.vector_store %arg6[%c0_14, %c0_15], %30 {strides = array<i32>} : memref<16x384xf32, #tpu.memory_space<vmem>>, vector<16x384xf32>,
    return
  }
  func.func @transform_0(%arg0: i32) -> (i32, i32) {
    %c0_i32 = arith.constant 0 : i32
    %c0_i32_0 = arith.constant 0 : i32
    return %arg0, %c0_i32 : i32, i32
  }
  func.func @transform_1(%arg0: i32) -> (i32, i32) {
    %c0_i32 = arith.constant 0 : i32
    %c0_i32_0 = arith.constant 0 : i32
    %c0_i32_1 = arith.constant 0 : i32
    return %c0_i32, %c0_i32_0 : i32, i32
  }
  func.func @transform_2(%arg0: i32) -> (i32, i32) {
    %c0_i32 = arith.constant 0 : i32
    %c0_i32_0 = arith.constant 0 : i32
    %c0_i32_1 = arith.constant 0 : i32
    return %c0_i32, %c0_i32_0 : i32, i32
  }
  func.func @transform_3(%arg0: i32) -> (i32, i32) {
    %c0_i32 = arith.constant 0 : i32
    %c0_i32_0 = arith.constant 0 : i32
    %c0_i32_1 = arith.constant 0 : i32
    return %c0_i32, %c0_i32_0 : i32, i32
  }
  func.func @transform_4(%arg0: i32) -> (i32, i32) {
    %c0_i32 = arith.constant 0 : i32
    %c0_i32_0 = arith.constant 0 : i32
    %c0_i32_1 = arith.constant 0 : i32
    return %c0_i32, %c0_i32_0 : i32, i32
  }
  func.func @transform_5(%arg0: i32) -> (i32, i32) {
    %c0_i32 = arith.constant 0 : i32
    %c0_i32_0 = arith.constant 0 : i32
    return %arg0, %c0_i32 : i32, i32
  }
}

</mosaic_0001>

<llo_original>
// kernel: tpu_custom_call.1
$region0: #{tpu_custom_call.1}
  #allocation0 [shape = 'u32[]', space=smem, size = 0x4, offset = 0x4, fixed_abs, tag = 'smem constant byte address 0x4 - core index']
  #allocation1 [shape = 'u32[72,128]{1,0:T(1,128)}', space=vmem, size = 0x9000, scoped, tag = 'internal scratch']
  %s0 = inlined_call_operand.hbm [shape: f32[8,128], index: 0, kind: input, shape index: {}]
  %s1 = inlined_call_operand.hbm [shape: f32[8,128], index: 1, kind: output, shape index: {}]
  %s2 = sld [smem:[#allocation0]]
  $region41: #{tpu_custom_call.1} parent=0
    _
  %s4 = ssub.s32 1, %s2
  %s5 = scalar_select 0, %s4, %s2
  $region1: #{tpu_custom_call.1} parent=0
    #allocation2 [shape = 'u8[4096]{0}', space=vmem, size = 0x1000, scoped, tag = 'input window, operand 0, single buffered']
    #allocation3 [shape = 's32[2]{0}', space=sflag, size = 0x8, scoped, tag = 'scoped memory for tpu_custom_call.1']
    #allocation4 [shape = 's32[2]{0}', space=sflag, size = 0x8, scoped, tag = 'scoped memory for tpu_custom_call.1']
    #allocation5 [shape = 'u8[4096]{0}', space=vmem, size = 0x1000, scoped, tag = 'output window, operand 0, single buffered']
    %6 = vsyncpa [#allocation3], 0
    %7 = vsyncpa [#allocation4], 0
    loop: start=0, step=1, limit=4
    $region2: #{tpu_custom_call.1} parent=1 // loop_pre_header
      _
    $region3: #{tpu_custom_call.1} parent=1 // loop_header
      %s9 = sphi 0, %s13
      %p10 = scmp.ge.s32.totalorder %s9, 4
      %s17 = sphi 0, %s17
      %s19 = sphi 0, %s17
      %s20 = sphi 0, %s19
      %s34 = sphi 0, %s20
      %s38 = sphi 0, %s38
      %s40 = sphi 0, %s38
      %s41 = sphi 0, %s40
      %s55 = sphi 0, %s41
    $region4: #{tpu_custom_call.1} parent=1 // loop_header_branch
      %12 = sbr.rel (%p10) target = $region8
    $region5: #{tpu_custom_call.1} parent=1 // loop_body
      %s14 = ssub.s32 %s9, 1
      %s15 = ssub.s32 %s9, 2
      %s16 = sadd.s32 %s9, 1
      %s18 = sadd.s32 %s17, 1
      %p21 = scmp.eq.s32.totalorder %s9, 1
      %p22 = scmp.ne.s32.totalorder %s17, %s19
      %p23 = scmp.eq.s32.totalorder %s9, 0
      %p24 = por %p22, %p23
      %p25 = scmp.ne.s32.totalorder %s17, %s19
      %p26 = scmp.eq.s32.totalorder %s14, 1
      %p27 = por %p25, %p26
      %p28 = scmp.ne.s32.totalorder %s19, %s20
      %p29 = scmp.eq.s32.totalorder %s14, 0
      %p30 = por %p28, %p29
      %p31 = scmp.ne.s32.totalorder %s19, %s20
      %p32 = scmp.eq.s32.totalorder %s15, 1
      %p33 = por %p31, %p32
      %p35 = scmp.ne.s32.totalorder %s20, %s34
      %p36 = scmp.eq.s32.totalorder %s15, 0
      %p37 = por %p35, %p36
      %s39 = sadd.s32 %s38, 1
      %p42 = scmp.eq.s32.totalorder %s9, 1
      %p43 = scmp.ne.s32.totalorder %s38, %s40
      %p44 = scmp.eq.s32.totalorder %s9, 0
      %p45 = por %p43, %p44
      %p46 = scmp.ne.s32.totalorder %s38, %s40
      %p47 = scmp.eq.s32.totalorder %s14, 1
      %p48 = por %p46, %p47
      %p49 = scmp.ne.s32.totalorder %s40, %s41
      %p50 = scmp.eq.s32.totalorder %s14, 0
      %p51 = por %p49, %p50
      %p52 = scmp.ne.s32.totalorder %s40, %s41
      %p53 = scmp.eq.s32.totalorder %s15, 1
      %p54 = por %p52, %p53
      %p56 = scmp.ne.s32.totalorder %s41, %s55
      %p57 = scmp.eq.s32.totalorder %s15, 0
      %p58 = por %p56, %p57
      %p59 = scmp.le.s32.totalorder 1, %s9
      %p60 = scmp.lt.s32.totalorder %s9, 3
      %p61 = pnand %p59, %p60
      %p62 = pneg %p61
      // Predicated region
      $region9: #{tpu_custom_call.1} parent=5 // pred_check
        _
      $region10: #{tpu_custom_call.1} parent=5 // pred_check_branch
        %64 = sbr.rel (%p61) target = $region12
      $region11: #{tpu_custom_call.1} parent=5 // pred_region
        %s65 = ssub.s32 %s9, 1
        // Predicated region
        $region13: #{tpu_custom_call.1} parent=11 // pred_check
          %p66 = pneg %p30
        $region14: #{tpu_custom_call.1} parent=11 // pred_check_branch
          %68 = sbr.rel (%p66) target = $region16
        $region15: #{tpu_custom_call.1} parent=11 // pred_region
          %70 = vsyncadd [#allocation3], 0
          %s72 = sshll.u32 %s0, 4
          %s73 = int_to_ptr.hbm [resolvable:$true] %s72
          %s74 = sshll.u32 [#allocation2], 4
          %s75 = int_to_ptr.vmem [resolvable:$true] %s74
          %77 = dma.hbm_to_vmem [thread:$0]  %s73, 128, %s75, [#allocation3]
        $region16: #{tpu_custom_call.1} parent=11 // pred_fallthru
          _
      $region12: #{tpu_custom_call.1} parent=5 // pred_fallthru
        _
      %p78 = scmp.lt.s32.totalorder %s9, 2
      // Predicated region
      $region17: #{tpu_custom_call.1} parent=5 // pred_check
        %p79 = pneg %p78
      $region18: #{tpu_custom_call.1} parent=5 // pred_check_branch
        %81 = sbr.rel (%p79) target = $region20
      $region19: #{tpu_custom_call.1} parent=5 // pred_region
        _
      $region20: #{tpu_custom_call.1} parent=5 // pred_fallthru
        _
      %p82 = scmp.le.s32.totalorder 1, %s9
      %p83 = scmp.lt.s32.totalorder %s9, 3
      %p84 = pnand %p82, %p83
      %p85 = pneg %p84
      // Predicated region
      $region21: #{tpu_custom_call.1} parent=5 // pred_check
        _
      $region22: #{tpu_custom_call.1} parent=5 // pred_check_branch
        %87 = sbr.rel (%p84) target = $region24
      $region23: #{tpu_custom_call.1} parent=5 // pred_region
        %s88 = ssub.s32 %s9, 1
        // Predicated region
        $region25: #{tpu_custom_call.1} parent=23 // pred_check
          %p89 = pneg %p30
        $region26: #{tpu_custom_call.1} parent=23 // pred_check_branch
          %91 = sbr.rel (%p89) target = $region28
        $region27: #{tpu_custom_call.1} parent=23 // pred_region
          %93 = dma.done [#allocation3], 128
        $region28: #{tpu_custom_call.1} parent=23 // pred_fallthru
          _
        %p94 = pneg %p30
        %p95 = pneg %p27
        %p96 = pneg %p51
        %p97 = pneg %p48
        %v98 = vld [vmem:[#allocation2] sm:$0xff]
        %v99 = vadd.f32 %v98, 1.0
        %100 = vst [vmem:[#allocation5] sm:$0xff] %v99
        // Predicated region
        $region29: #{tpu_custom_call.1} parent=23 // pred_check
          %p101 = pneg %p48
        $region30: #{tpu_custom_call.1} parent=23 // pred_check_branch
          %103 = sbr.rel (%p101) target = $region32
        $region31: #{tpu_custom_call.1} parent=23 // pred_region
          %105 = vsyncadd [#allocation4], 0
          %s107 = sshll.u32 [#allocation5], 4
          %s108 = int_to_ptr.vmem [resolvable:$true] %s107
          %s109 = sshll.u32 %s1, 4
          %s110 = int_to_ptr.hbm [resolvable:$true] %s109
          %112 = dma.vmem_to_hbm [thread:$0]  %s108, 128, %s110, [#allocation4]
        $region32: #{tpu_custom_call.1} parent=23 // pred_fallthru
          _
        // Predicated region
        $region33: #{tpu_custom_call.1} parent=23 // pred_check
          %p113 = pneg %p48
        $region34: #{tpu_custom_call.1} parent=23 // pred_check_branch
          %115 = sbr.rel (%p113) target = $region36
        $region35: #{tpu_custom_call.1} parent=23 // pred_region
          %117 = dma.done [#allocation4], 128
        $region36: #{tpu_custom_call.1} parent=23 // pred_fallthru
          _
      $region24: #{tpu_custom_call.1} parent=5 // pred_fallthru
        _
      %p118 = scmp.le.s32.totalorder 2, %s9
      // Predicated region
      $region37: #{tpu_custom_call.1} parent=5 // pred_check
        %p119 = pneg %p118
      $region38: #{tpu_custom_call.1} parent=5 // pred_check_branch
        %121 = sbr.rel (%p119) target = $region40
      $region39: #{tpu_custom_call.1} parent=5 // pred_region
        %s122 = ssub.s32 %s9, 2
      $region40: #{tpu_custom_call.1} parent=5 // pred_fallthru
        _
    $region6: #{tpu_custom_call.1} parent=1 // loop_footer
      %s13 = sadd.s32 1, %s9
    $region7: #{tpu_custom_call.1} parent=1 // loop_footer_branch
      %8 = sbr.rel target = $region3
    $region8: #{tpu_custom_call.1} parent=1 // loop_exit
      _
    %123 = vsyncpa [#allocation3], 1
    %s124 = scalar_lea.sflag [#allocation3], 1
    %125 = vsyncpa %s124, 1
    %126 = vsyncpa [#allocation4], 1
    %s127 = scalar_lea.sflag [#allocation4], 1
    %128 = vsyncpa %s127, 1

// kernel: tpu_custom_call.1
$region0: #{tpu_custom_call.1}
  #allocation0 [shape = 'u32[]', space=smem, size = 0x4, offset = 0x4, fixed_abs, tag = 'smem constant byte address 0x4 - core index']
  #allocation1 [shape = 'u32[72,128]{1,0:T(1,128)}', space=vmem, size = 0x9000, scoped, tag = 'internal scratch']
  %s0 = inlined_call_operand.hbm [shape: f32[16,128], index: 0, kind: input, shape index: {}]
  %s1 = inlined_call_operand.hbm [shape: f32[1,128], index: 1, kind: input, shape index: {}]
  %s2 = inlined_call_operand.hbm [shape: f32[1,128], index: 2, kind: input, shape index: {}]
  %s3 = inlined_call_operand.hbm [shape: f32[128,384], index: 3, kind: input, shape index: {}]
  %s4 = inlined_call_operand.vmem [shape: f32[1,384], index: 4, kind: input, shape index: {}]
  %s5 = inlined_call_operand.hbm [shape: f32[16,384], index: 5, kind: output, shape index: {}]
  %s6 = sld [smem:[#allocation0]]
  $region46: #{tpu_custom_call.1} parent=0
    _
  %s8 = ssub.s32 1, %s6
  %s9 = scalar_select 0, %s8, %s6
  $region1: #{tpu_custom_call.1} parent=0
    #allocation2 [shape = 'u8[8192]{0}', space=vmem, size = 0x2000, scoped, tag = 'input window, operand 0, single buffered']
    #allocation3 [shape = 's32[1]{0}', space=sflag, size = 0x4, scoped, tag = 'scoped memory for tpu_custom_call.1']
    #allocation4 [shape = 's32[1]{0}', space=sflag, size = 0x4, scoped, tag = 'scoped memory for tpu_custom_call.1']
    #allocation5 [shape = 'u8[512]{0}', space=vmem, size = 0x400, scoped, tag = 'input window, operand 1, single buffered']
    #allocation6 [shape = 's32[1]{0}', space=sflag, size = 0x4, scoped, tag = 'scoped memory for tpu_custom_call.1']
    #allocation7 [shape = 'u8[512]{0}', space=vmem, size = 0x400, scoped, tag = 'input window, operand 2, single buffered']
    #allocation8 [shape = 'u8[196608]{0}', space=vmem, size = 0x30000, scoped, tag = 'input window, operand 3, single buffered']
    #allocation9 [shape = 's32[1]{0}', space=sflag, size = 0x4, scoped, tag = 'scoped memory for tpu_custom_call.1']
    #allocation10 [shape = 'u8[24576]{0}', space=vmem, size = 0x6000, scoped, tag = 'output window, operand 0, single buffered']
    %10 = vsyncpa [#allocation3], 0
    %11 = vsyncpa [#allocation6], 0
    %12 = vsyncpa [#allocation9], 0
    %13 = vsyncpa [#allocation4], 0
    // Predicated region
    $region2: #{tpu_custom_call.1} parent=1 // pred_check
      _
    $region3: #{tpu_custom_call.1} parent=1 // pred_check_branch
      %15 = sbr.rel (0) target = $region5
    $region4: #{tpu_custom_call.1} parent=1 // pred_region
      %17 = vsyncadd [#allocation3], 0
      %s18 = sshll.u32 %s0, 4
      %s19 = int_to_ptr.hbm [resolvable:$true] %s18
      %s20 = sshll.u32 [#allocation2], 4
      %s21 = int_to_ptr.vmem [resolvable:$true] %s20
      %26 = dma.hbm_to_vmem [thread:$0]  %s19, 256, %s21, [#allocation3], 128, 128, 8
    $region5: #{tpu_custom_call.1} parent=1 // pred_fallthru
      _
    // Predicated region
    $region6: #{tpu_custom_call.1} parent=1 // pred_check
      _
    $region7: #{tpu_custom_call.1} parent=1 // pred_check_branch
      %28 = sbr.rel (0) target = $region9
    $region8: #{tpu_custom_call.1} parent=1 // pred_region
      %30 = vsyncadd [#allocation6], 0
      %s32 = sshll.u32 %s1, 4
      %s33 = int_to_ptr.hbm [resolvable:$true] %s32
      %s34 = sshll.u32 [#allocation5], 4
      %s35 = int_to_ptr.vmem [resolvable:$true] %s34
      %37 = dma.hbm_to_vmem [thread:$0]  %s33, 16, %s35, [#allocation6]
    $region9: #{tpu_custom_call.1} parent=1 // pred_fallthru
      _
    // Predicated region
    $region10: #{tpu_custom_call.1} parent=1 // pred_check
      _
    $region11: #{tpu_custom_call.1} parent=1 // pred_check_branch
      %39 = sbr.rel (0) target = $region13
    $region12: #{tpu_custom_call.1} parent=1 // pred_region
      %41 = vsyncadd [#allocation6], 0
      %s43 = sshll.u32 %s2, 4
      %s44 = int_to_ptr.hbm [resolvable:$true] %s43
      %s45 = sshll.u32 [#allocation7], 4
      %s46 = int_to_ptr.vmem [resolvable:$true] %s45
      %48 = dma.hbm_to_vmem [thread:$0]  %s44, 16, %s46, [#allocation6]
    $region13: #{tpu_custom_call.1} parent=1 // pred_fallthru
      _
    // Predicated region
    $region14: #{tpu_custom_call.1} parent=1 // pred_check
      _
    $region15: #{tpu_custom_call.1} parent=1 // pred_check_branch
      %50 = sbr.rel (0) target = $region17
    $region16: #{tpu_custom_call.1} parent=1 // pred_region
      %52 = vsyncadd [#allocation9], 0
      %s53 = sshll.u32 %s3, 4
      %s54 = int_to_ptr.hbm [resolvable:$true] %s53
      %s55 = sshll.u32 [#allocation8], 4
      %s56 = int_to_ptr.vmem [resolvable:$true] %s55
      %61 = dma.hbm_to_vmem [thread:$0]  %s54, 6144, %s56, [#allocation9], 384, 384, 24
    $region17: #{tpu_custom_call.1} parent=1 // pred_fallthru
      _
    // Predicated region
    $region18: #{tpu_custom_call.1} parent=1 // pred_check
      _
    $region19: #{tpu_custom_call.1} parent=1 // pred_check_branch
      %63 = sbr.rel (0) target = $region21
    $region20: #{tpu_custom_call.1} parent=1 // pred_region
      _
    $region21: #{tpu_custom_call.1} parent=1 // pred_fallthru
      _
    // Predicated region
    $region22: #{tpu_custom_call.1} parent=1 // pred_check
      _
    $region23: #{tpu_custom_call.1} parent=1 // pred_check_branch
      %65 = sbr.rel (0) target = $region25
    $region24: #{tpu_custom_call.1} parent=1 // pred_region
      %67 = dma.done [#allocation3], 256
    $region25: #{tpu_custom_call.1} parent=1 // pred_fallthru
      _
    // Predicated region
    $region26: #{tpu_custom_call.1} parent=1 // pred_check
      _
    $region27: #{tpu_custom_call.1} parent=1 // pred_check_branch
      %69 = sbr.rel (0) target = $region29
    $region28: #{tpu_custom_call.1} parent=1 // pred_region
      %71 = dma.done [#allocation6], 16
    $region29: #{tpu_custom_call.1} parent=1 // pred_fallthru
      _
    // Predicated region
    $region30: #{tpu_custom_call.1} parent=1 // pred_check
      _
    $region31: #{tpu_custom_call.1} parent=1 // pred_check_branch
      %73 = sbr.rel (0) target = $region33
    $region32: #{tpu_custom_call.1} parent=1 // pred_region
      %75 = dma.done [#allocation6], 16
    $region33: #{tpu_custom_call.1} parent=1 // pred_fallthru
      _
    // Predicated region
    $region34: #{tpu_custom_call.1} parent=1 // pred_check
      _
    $region35: #{tpu_custom_call.1} parent=1 // pred_check_branch
      %77 = sbr.rel (0) target = $region37
    $region36: #{tpu_custom_call.1} parent=1 // pred_region
      %79 = dma.done [#allocation9], 6144
    $region37: #{tpu_custom_call.1} parent=1 // pred_fallthru
      _
    %v80 = vld [vmem:[#allocation2] sm:$0xff]
    %v81 = vld [vmem:[#allocation2 + $0x8] sm:$0xff]
    %v82 = vld [vmem:[#allocation5] sm:$0x1]
    %v83 = vld [vmem:[#allocation7] sm:$0x1]
    %84 = vadd.xlane.f32.xlu0 %v80
    %v85 = vpop.xlane.xlu0 %84
    %86 = vadd.xlane.f32.xlu0 %v81
    %v87 = vpop.xlane.xlu0 %86
    %v88 = vrcp.pop 128.0
    %v89 = vmul.f32 128.0, %v88
    %v90 = vsub.f32 1.0, %v89
    %v91 = vmul.f32 %v88, %v90
    %v92 = vadd.f32 %v88, %v91
    %vm93 = vweird.f32 %v88
    %v94 = vsel %vm93, %v88, %v92
    %v95 = vmul.f32 %v85, %v94
    %v96 = vmul.f32 %v87, %v94
    %v97 = vsub.f32 %v80, %v95
    %v98 = vsub.f32 %v81, %v96
    %v99 = vmul.f32 %v97, %v97
    %v100 = vmul.f32 %v98, %v98
    %101 = vadd.xlane.f32.xlu0 %v99
    %v102 = vpop.xlane.xlu0 %101
    %103 = vadd.xlane.f32.xlu0 %v100
    %v104 = vpop.xlane.xlu0 %103
    %v105 = vmul.f32 %v102, 0.007874016
    %v106 = vmul.f32 %v104, 0.007874016
    %v107 = vrsqrt.pop %v105
    %v108 = vmul.f32 %v107, %v105
    %v109 = vmul.f32 %v108, %v107
    %v110 = vmul.f32 0.5, %v109
    %v111 = vsub.f32 1.5, %v110
    %v112 = vmul.f32 %v107, %v111
    %v113 = vmul.f32 %v105, %v112
    %vm114 = vcmp.eq.f32.partialorder %v105, inf
    %v115 = vsel %vm114, %v105, %v113
    %vm116 = vcmp.eq.f32.partialorder %v105, 0.0
    %v117 = vand.u32 %v105, 2147483648
    %v118 = vsel %vm116, %v117, %v115
    %v119 = vrsqrt.pop %v106
    %v120 = vmul.f32 %v119, %v106
    %v121 = vmul.f32 %v120, %v119
    %v122 = vmul.f32 0.5, %v121
    %v123 = vsub.f32 1.5, %v122
    %v124 = vmul.f32 %v119, %v123
    %v125 = vmul.f32 %v106, %v124
    %vm126 = vcmp.eq.f32.partialorder %v106, inf
    %v127 = vsel %vm126, %v106, %v125
    %vm128 = vcmp.eq.f32.partialorder %v106, 0.0
    %v129 = vand.u32 %v106, 2147483648
    %v130 = vsel %vm128, %v129, %v127
    %v131 = vadd.f32 %v118, 1e-06
    %v132 = vadd.f32 %v130, 1e-06
    %v133 = vrcp.pop %v131
    %v134 = vmul.f32 %v131, %v133
    %v135 = vsub.f32 1.0, %v134
    %v136 = vmul.f32 %v133, %v135
    %v137 = vadd.f32 %v133, %v136
    %vm138 = vweird.f32 %v131
    %vm139 = vweird.f32 %v133
    %vm140 = vmor %vm138, %vm139
    %v141 = vsel %vm140, %v133, %v137
    %v142 = vand.u32 2147483647, %v131
    %vm143 = vcmp.eq.f32.partialorder %v142, 8.507059e+37
    %v144 = vand.u32 %v131, 2147483648
    %v145 = vor.u32 1.1754944e-38, %v144
    %v146 = vsel %vm143, %v145, %v141
    %v147 = vrcp.pop %v132
    %v148 = vmul.f32 %v132, %v147
    %v149 = vsub.f32 1.0, %v148
    %v150 = vmul.f32 %v147, %v149
    %v151 = vadd.f32 %v147, %v150
    %vm152 = vweird.f32 %v132
    %vm153 = vweird.f32 %v147
    %vm154 = vmor %vm152, %vm153
    %v155 = vsel %vm154, %v147, %v151
    %v156 = vand.u32 2147483647, %v132
    %vm157 = vcmp.eq.f32.partialorder %v156, 8.507059e+37
    %v158 = vand.u32 %v132, 2147483648
    %v159 = vor.u32 1.1754944e-38, %v158
    %v160 = vsel %vm157, %v159, %v155
    %v161 = vmul.f32 %v97, %v146
    %v162 = vmul.f32 %v98, %v160
    %v164 = vperm.slane %v82, 0
    %v166 = vmul.f32 %v164, %v161
    %v167 = vmul.f32 %v164, %v162
    %v169 = vperm.slane %v83, 0
    %v171 = vadd.f32 %v166, %v169
    %v172 = vadd.f32 %v167, %v169
    %v173 = vld [vmem:[#allocation8] sm:$0xff]
    %v174 = vld [vmem:[#allocation8 + $0x8] sm:$0xff]
    %v175 = vld [vmem:[#allocation8 + $0x10] sm:$0xff]
    %v176 = vld [vmem:[#allocation8 + $0x18] sm:$0xff]
    %v177 = vld [vmem:[#allocation8 + $0x20] sm:$0xff]
    %v178 = vld [vmem:[#allocation8 + $0x28] sm:$0xff]
    %v179 = vld [vmem:[#allocation8 + $0x30] sm:$0xff]
    %v180 = vld [vmem:[#allocation8 + $0x38] sm:$0xff]
    %v181 = vld [vmem:[#allocation8 + $0x40] sm:$0xff]
    %v182 = vld [vmem:[#allocation8 + $0x48] sm:$0xff]
    %v183 = vld [vmem:[#allocation8 + $0x50] sm:$0xff]
    %v184 = vld [vmem:[#allocation8 + $0x58] sm:$0xff]
    %v185 = vld [vmem:[#allocation8 + $0x60] sm:$0xff]
    %v186 = vld [vmem:[#allocation8 + $0x68] sm:$0xff]
    %v187 = vld [vmem:[#allocation8 + $0x70] sm:$0xff]
    %v188 = vld [vmem:[#allocation8 + $0x78] sm:$0xff]
    %v189 = vld [vmem:[#allocation8 + $0x80] sm:$0xff]
    %v190 = vld [vmem:[#allocation8 + $0x88] sm:$0xff]
    %v191 = vld [vmem:[#allocation8 + $0x90] sm:$0xff]
    %v192 = vld [vmem:[#allocation8 + $0x98] sm:$0xff]
    %v193 = vld [vmem:[#allocation8 + $0xa0] sm:$0xff]
    %v194 = vld [vmem:[#allocation8 + $0xa8] sm:$0xff]
    %v195 = vld [vmem:[#allocation8 + $0xb0] sm:$0xff]
    %v196 = vld [vmem:[#allocation8 + $0xb8] sm:$0xff]
    %v197 = vld [vmem:[#allocation8 + $0xc0] sm:$0xff]
    %v198 = vld [vmem:[#allocation8 + $0xc8] sm:$0xff]
    %v199 = vld [vmem:[#allocation8 + $0xd0] sm:$0xff]
    %v200 = vld [vmem:[#allocation8 + $0xd8] sm:$0xff]
    %v201 = vld [vmem:[#allocation8 + $0xe0] sm:$0xff]
    %v202 = vld [vmem:[#allocation8 + $0xe8] sm:$0xff]
    %v203 = vld [vmem:[#allocation8 + $0xf0] sm:$0xff]
    %v204 = vld [vmem:[#allocation8 + $0xf8] sm:$0xff]
    %v205 = vld [vmem:[#allocation8 + $0x100] sm:$0xff]
    %v206 = vld [vmem:[#allocation8 + $0x108] sm:$0xff]
    %v207 = vld [vmem:[#allocation8 + $0x110] sm:$0xff]
    %v208 = vld [vmem:[#allocation8 + $0x118] sm:$0xff]
    %v209 = vld [vmem:[#allocation8 + $0x120] sm:$0xff]
    %v210 = vld [vmem:[#allocation8 + $0x128] sm:$0xff]
    %v211 = vld [vmem:[#allocation8 + $0x130] sm:$0xff]
    %v212 = vld [vmem:[#allocation8 + $0x138] sm:$0xff]
    %v213 = vld [vmem:[#allocation8 + $0x140] sm:$0xff]
    %v214 = vld [vmem:[#allocation8 + $0x148] sm:$0xff]
    %v215 = vld [vmem:[#allocation8 + $0x150] sm:$0xff]
    %v216 = vld [vmem:[#allocation8 + $0x158] sm:$0xff]
    %v217 = vld [vmem:[#allocation8 + $0x160] sm:$0xff]
    %v218 = vld [vmem:[#allocation8 + $0x168] sm:$0xff]
    %v219 = vld [vmem:[#allocation8 + $0x170] sm:$0xff]
    %v220 = vld [vmem:[#allocation8 + $0x178] sm:$0xff]
    %v221 = vld [vmem:[%s4] sm:$0x7]
    %v223 = vperm.slane %v221, 0
    %v224 = vperm.slane %v221, 1
    %v225 = vperm.slane %v221, 2
    %229 = vmatpush.msra.mxu0 %v218
    %230 = vmatpush.msra.mxu0 %v215
    %231 = vmatpush.msra.mxu0 %v212
    %232 = vmatpush.msra.mxu0 %v209
    %233 = vmatpush.msra.mxu0 %v206
    %234 = vmatpush.msra.mxu0 %v203
    %235 = vmatpush.msra.mxu0 %v200
    %236 = vmatpush.msra.mxu0 %v197
    %237 = vmatpush.msra.mxu0 %v194
    %238 = vmatpush.msra.mxu0 %v191
    %239 = vmatpush.msra.mxu0 %v188
    %240 = vmatpush.msra.mxu0 %v185
    %241 = vmatpush.msra.mxu0 %v182
    %242 = vmatpush.msra.mxu0 %v179
    %243 = vmatpush.msra.mxu0 %v176
    %244 = vmatpush.msra.mxu0 %v173
    %245 = vmatmul.f32.gmra.mxu0 %v171
    %v246 = vpop.f32.mrf.mxu0
    %v247 = vadd.f32 %v223, %v246
    %248 = vmatmul.f32.gmra.mxu0 %v172
    %v249 = vpop.f32.mrf.mxu0
    %v250 = vadd.f32 %v223, %v249
    %251 = vdwg.mxu0
    %252 = vmatpush.msra.mxu0 %v219
    %253 = vmatpush.msra.mxu0 %v216
    %254 = vmatpush.msra.mxu0 %v213
    %255 = vmatpush.msra.mxu0 %v210
    %256 = vmatpush.msra.mxu0 %v207
    %257 = vmatpush.msra.mxu0 %v204
    %258 = vmatpush.msra.mxu0 %v201
    %259 = vmatpush.msra.mxu0 %v198
    %260 = vmatpush.msra.mxu0 %v195
    %261 = vmatpush.msra.mxu0 %v192
    %262 = vmatpush.msra.mxu0 %v189
    %263 = vmatpush.msra.mxu0 %v186
    %264 = vmatpush.msra.mxu0 %v183
    %265 = vmatpush.msra.mxu0 %v180
    %266 = vmatpush.msra.mxu0 %v177
    %267 = vmatpush.msra.mxu0 %v174
    %268 = vmatmul.f32.gmra.mxu0 %v171
    %v269 = vpop.f32.mrf.mxu0
    %v270 = vadd.f32 %v224, %v269
    %271 = vmatmul.f32.gmra.mxu0 %v172
    %v272 = vpop.f32.mrf.mxu0
    %v273 = vadd.f32 %v224, %v272
    %274 = vdwg.mxu0
    %275 = vmatpush.msra.mxu0 %v220
    %276 = vmatpush.msra.mxu0 %v217
    %277 = vmatpush.msra.mxu0 %v214
    %278 = vmatpush.msra.mxu0 %v211
    %279 = vmatpush.msra.mxu0 %v208
    %280 = vmatpush.msra.mxu0 %v205
    %281 = vmatpush.msra.mxu0 %v202
    %282 = vmatpush.msra.mxu0 %v199
    %283 = vmatpush.msra.mxu0 %v196
    %284 = vmatpush.msra.mxu0 %v193
    %285 = vmatpush.msra.mxu0 %v190
    %286 = vmatpush.msra.mxu0 %v187
    %287 = vmatpush.msra.mxu0 %v184
    %288 = vmatpush.msra.mxu0 %v181
    %289 = vmatpush.msra.mxu0 %v178
    %290 = vmatpush.msra.mxu0 %v175
    %291 = vmatmul.f32.gmra.mxu0 %v171
    %v292 = vpop.f32.mrf.mxu0
    %v293 = vadd.f32 %v225, %v292
    %294 = vmatmul.f32.gmra.mxu0 %v172
    %v295 = vpop.f32.mrf.mxu0
    %v296 = vadd.f32 %v225, %v295
    %297 = vdwg.mxu0
    %298 = vst [vmem:[#allocation10] sm:$0xff] %v247
    %299 = vst [vmem:[#allocation10 + $0x8] sm:$0xff] %v270
    %300 = vst [vmem:[#allocation10 + $0x10] sm:$0xff] %v293
    %301 = vst [vmem:[#allocation10 + $0x18] sm:$0xff] %v250
    %302 = vst [vmem:[#allocation10 + $0x20] sm:$0xff] %v273
    %303 = vst [vmem:[#allocation10 + $0x28] sm:$0xff] %v296
    // Predicated region
    $region38: #{tpu_custom_call.1} parent=1 // pred_check
      _
    $region39: #{tpu_custom_call.1} parent=1 // pred_check_branch
      %305 = sbr.rel (0) target = $region41
    $region40: #{tpu_custom_call.1} parent=1 // pred_region
      %307 = vsyncadd [#allocation4], 0
      %s308 = sshll.u32 [#allocation10], 4
      %s309 = int_to_ptr.vmem [resolvable:$true] %s308
      %s310 = sshll.u32 %s5, 4
      %s311 = int_to_ptr.hbm [resolvable:$true] %s310
      %316 = dma.vmem_to_hbm [thread:$0]  %s309, 768, %s311, [#allocation4], 384, 384, 24
    $region41: #{tpu_custom_call.1} parent=1 // pred_fallthru
      _
    // Predicated region
    $region42: #{tpu_custom_call.1} parent=1 // pred_check
      _
    $region43: #{tpu_custom_call.1} parent=1 // pred_check_branch
      %318 = sbr.rel (0) target = $region45
    $region44: #{tpu_custom_call.1} parent=1 // pred_region
      %320 = dma.done [#allocation4], 768
    $region45: #{tpu_custom_call.1} parent=1 // pred_fallthru
      _
    %321 = vsyncpa [#allocation3], 1
    %322 = vsyncpa [#allocation6], 1
    %323 = vsyncpa [#allocation9], 1
    %324 = vsyncpa [#allocation4], 1

</llo_original>
